<compile_context>
chip_gen: v5e
topology: v5e:2x2
jax: 0.10.0
libtpu: 0.0.40
codegen_flags: <defaults>
</compile_context>

<pallas_src>
import jax
import jax.numpy as jnp
from jax.experimental import pallas as pl
from jax.experimental.pallas import tpu as pltpu

_LANE = 128
_SUBLANE = 8
_MAX_TILE_B = 2048                 # hard cap on batch-tile rows
_TARGET_X_TILE_BYTES = 4 << 20     # aim for >=4 MiB of x per grid step
_MIN_SPLIT_X_BYTES = 2 << 20       # only split a 1-tile batch (v7x 2nd TC) if
                                   # each half still carries >=1 MiB of x


def _cdiv(a, b):
    return -(-a // b)


def _round_up(x, m):
    return _cdiv(x, m) * m


def _vmem_capacity_bytes():
    """Physical VMEM per TensorCore (generation-aware, with safe fallback)."""
    try:
        cap = getattr(pltpu.get_tpu_info(), "vmem_capacity_bytes", None)
        if cap:
            return int(cap)
    except Exception:
        pass
    return 64 * 1024 * 1024   # conservative fallback = v7x per-TC VMEM


def _vmem_budget_bytes():
    return (_vmem_capacity_bytes() * 5) // 8


def _plan_k(d_in, d_out_p, w_itemsize):
    """Decide the K (d_in) tiling. Returns (num_k, tile_k, d_in_p).

    Prefer a single full-K step: the weight BlockSpec index is then constant,
    so W is DMA'd from HBM once and stays VMEM-resident while x streams, and
    x needs no d_in padding (block dim == full array dim).
    """
    budget = _vmem_budget_bytes()
    if 2 * d_in * d_out_p * w_itemsize <= budget // 2:
        return 1, d_in, d_in
    # Multi-K fallback (very large d_in): cap tile_k so the double-buffered
    # W tile stays within a quarter of the budget; K blocks must be exactly
    # covered, so d_in is zero-padded to tile_k * num_k.
    per_k_bytes = 2 * d_out_p * w_itemsize
    cap_k = max(_LANE, ((budget // 4) // per_k_bytes) // _LANE * _LANE)
    d_in_128 = _round_up(d_in, _LANE)
    num_k = _cdiv(d_in_128, cap_k)
    tile_k = _round_up(_cdiv(d_in_128, num_k), _LANE)
    num_k = _cdiv(d_in_128, tile_k)
    return num_k, tile_k, tile_k * num_k


def _plan_b(B, tile_k, d_out_p, num_k, x_itemsize, out_itemsize, w_itemsize):
    """Balanced batch tiling sized for VMEM + DMA efficiency."""
    granule = _SUBLANE if x_itemsize >= 4 else 32 // x_itemsize   # 8 f32, 16 bf16
    budget = _vmem_budget_bytes()
    w_resident = 2 * tile_k * d_out_p * w_itemsize
    per_row = (2 * tile_k * x_itemsize                # double-buffered x tile
               + 2 * d_out_p * out_itemsize           # double-buffered out tile
               + (d_out_p * 4 if num_k > 1 else 0))   # f32 accumulator (multi-K)
    vmem_rows = max(granule, (budget - w_resident) // per_row)
    target_rows = max(granule, _TARGET_X_TILE_BYTES // (tile_k * x_itemsize))
    max_b = min(_MAX_TILE_B, target_rows, vmem_rows)
    max_b = max(granule, (max_b // granule) * granule)
    num_b = max(1, _cdiv(B, max_b))
    # v7x megacore: give the "parallel" batch axis >=2 steps when each half
    # still moves enough bytes to beat the per-step pipeline overhead.
    if num_b == 1 and B >= 2 * granule and B * tile_k * x_itemsize >= _MIN_SPLIT_X_BYTES:
        num_b = 2
    return _round_up(_cdiv(B, num_b), granule)


def _linear_bias_kernel(x_ref, w_ref, b_ref, o_ref):
    """Single full-K step: z = x @ W + b (MXU, f32 accumulate), no scratch."""
    o_ref[...] = (
        jnp.dot(x_ref[...], w_ref[...], preferred_element_type=jnp.float32)
        + b_ref[...]
    ).astype(o_ref.dtype)


def _linear_bias_acc_kernel(x_ref, w_ref, b_ref, o_ref, acc_ref):
    """Multi-K: f32 accumulator seeded with the bias at k==0, stored at k==last."""
    k = pl.program_id(1)

    @pl.when(k == 0)
    def _():
        acc_ref[...] = jnp.zeros_like(acc_ref) + b_ref[...]   # broadcast bias

    acc_ref[...] += jnp.dot(
        x_ref[...], w_ref[...], preferred_element_type=jnp.float32
    )

    @pl.when(k == pl.num_programs(1) - 1)
    def _():
        o_ref[...] = acc_ref[...].astype(o_ref.dtype)


def prepare_params(weight, bias, param_dtype=None):
    """One-time conversion from torch.nn.Linear layout to kernel layout.

    weight: (d_out, d_in) -> (d_in_p, d_out_p)  transposed (+ zero-padded)
    bias:   (d_out,)      -> (1, d_out_p)       f32
    param_dtype: optional storage dtype for W (e.g. jnp.bfloat16 halves HBM traffic).
    """
    weight = jnp.asarray(weight)
    bias = jnp.asarray(bias)
    if param_dtype is not None:
        weight = weight.astype(param_dtype)
    d_out, d_in = weight.shape
    d_out_p = _round_up(d_out, _LANE)   # lane-dense W columns / output lanes
    _, _, d_in_p = _plan_k(d_in, d_out_p, weight.dtype.itemsize)
    w_t = weight.T
    if (d_in_p, d_out_p) != (d_in, d_out):
        w_t = jnp.pad(w_t, ((0, d_in_p - d_in), (0, d_out_p - d_out)))
    b2 = jnp.pad(bias.astype(jnp.float32), (0, d_out_p - d_out)).reshape(1, d_out_p)
    return w_t, b2, d_out


def logreg_forward(x, w_t, b2, d_out):
    """x: (B, d_in); w_t/b2 from prepare_params; returns (B, d_out) logits."""
    B, d_in = x.shape
    d_in_w, d_out_p = w_t.shape
    x_isz = x.dtype.itemsize
    w_isz = w_t.dtype.itemsize

    num_k, tile_k, d_in_p = _plan_k(d_in, d_out_p, w_isz)
    assert d_in_p == d_in_w, "params were prepared for a different d_in / dtype"

    # Only the (rare, very-large-d_in) multi-K path needs x padded along d_in
    # so every K block is zero-backed.  The batch dimension is never padded:
    # Pallas mask-stores the partial edge block and rows are independent.
    if d_in_p != d_in:
        x = jnp.pad(x, ((0, 0), (0, d_in_p - d_in)))

    tile_b = _plan_b(B, tile_k, d_out_p, num_k, x_isz, x_isz, w_isz)
    grid_b = _cdiv(B, tile_b)

    if num_k == 1:
        kernel = _linear_bias_kernel
        grid = (grid_b,)
        in_specs = [
            pl.BlockSpec((tile_b, tile_k), lambda i: (i, 0)),     # x streams
            pl.BlockSpec((tile_k, d_out_p), lambda i: (0, 0)),    # W resident
            pl.BlockSpec((1, d_out_p), lambda i: (0, 0)),         # bias resident
        ]
        out_specs = pl.BlockSpec((tile_b, d_out_p), lambda i: (i, 0))
        scratch_shapes = []
        dim_sem = ("parallel",)
        w_streams = 1
    else:
        kernel = _linear_bias_acc_kernel
        grid = (grid_b, num_k)
        in_specs = [
            pl.BlockSpec((tile_b, tile_k), lambda i, k: (i, k)),
            pl.BlockSpec((tile_k, d_out_p), lambda i, k: (k, 0)),
            pl.BlockSpec((1, d_out_p), lambda i, k: (0, 0)),
        ]
        out_specs = pl.BlockSpec((tile_b, d_out_p), lambda i, k: (i, 0))
        scratch_shapes = [pltpu.VMEM((tile_b, d_out_p), jnp.float32)]
        dim_sem = ("parallel", "arbitrary")
        w_streams = grid_b   # W re-streamed per batch tile in the multi-K case

    # Generation-aware VMEM limit with headroom (v7x: 64 MiB/TC; v5e/v6e: 128 MiB).
    needed = (2 * tile_k * d_out_p * w_isz
              + 2 * _SUBLANE * d_out_p * 4
              + 2 * tile_b * tile_k * x_isz
              + 2 * tile_b * d_out_p * x_isz
              + (tile_b * d_out_p * 4 if num_k > 1 else 0))
    vmem_limit = int(min((_vmem_capacity_bytes() * 3) // 4,
                         max(2 * needed, 32 << 20)))

    out = pl.pallas_call(
        kernel,
        out_shape=jax.ShapeDtypeStruct((B, d_out_p), x.dtype),
        grid_spec=pltpu.PrefetchScalarGridSpec(
            num_scalar_prefetch=0,
            grid=grid,
            in_specs=in_specs,
            out_specs=out_specs,
            scratch_shapes=scratch_shapes,
        ),
        compiler_params=pltpu.CompilerParams(
            dimension_semantics=dim_sem,
            vmem_limit_bytes=vmem_limit,
        ),
        cost_estimate=pl.CostEstimate(
            flops=2 * B * d_in_p * d_out_p,
            transcendentals=0,
            bytes_accessed=(B * d_in_p * x_isz
                            + w_streams * d_in_p * d_out_p * w_isz
                            + B * d_out_p * x_isz
                            + d_out_p * 4),
        ),
    )(x, w_t, b2)

    return out[:, :d_out]


def init_logreg_params(key, d_in, d_out, dtype=jnp.float32):
    """Deterministic init mimicking torch.nn.Linear: U(-1/sqrt(d_in), 1/sqrt(d_in))."""
    kw, kb = jax.random.split(key)
    bound = 1.0 / (d_in ** 0.5)
    weight = jax.random.uniform(kw, (d_out, d_in), dtype, -bound, bound)
    bias = jax.random.uniform(kb, (d_out,), dtype, -bound, bound)
    return weight, bias


def _check_f32(key, B, d_in, d_out):
    k_x, k_p = jax.random.split(key)
    x = jax.random.normal(k_x, (B, d_in), jnp.float32)
    weight, bias = init_logreg_params(k_p, d_in, d_out)

    w_t, b2, d_out_logical = prepare_params(weight, bias)   # one-time prep
    z = logreg_forward(x, w_t, b2, d_out_logical)
    jax.block_until_ready(z)

    z_ref = x @ weight.T + bias   # same math as torch.nn.Linear forward
    assert z.shape == (B, d_out)
    assert jnp.allclose(z, z_ref, atol=1e-5, rtol=1e-5)


def _check_bf16(key, B, d_in, d_out):
    k_x, k_p = jax.random.split(key)
    x = jax.random.normal(k_x, (B, d_in), jnp.float32).astype(jnp.bfloat16)
    weight, bias = init_logreg_params(k_p, d_in, d_out)

    w_t, b2, d_out_logical = prepare_params(weight, bias, param_dtype=jnp.bfloat16)
    z = logreg_forward(x, w_t, b2, d_out_logical)
    jax.block_until_ready(z)

    # Reference in f32 from the same bf16-quantized inputs (kernel accumulates f32).
    z_ref = (x.astype(jnp.float32) @ weight.astype(jnp.bfloat16).astype(jnp.float32).T
             + bias)
    assert z.shape == (B, d_out)
    assert jnp.allclose(z.astype(jnp.float32), z_ref, atol=3e-2, rtol=3e-2)


if __name__ == "__main__":
    key = jax.random.PRNGKey(0)
    k0, k1, k2 = jax.random.split(key, 3)

    # Tiny case at the module's scale (single tile, full-K).
    _check_f32(k0, B=8, d_in=32, d_out=16)
    # Ragged case: batch not a tile multiple, d_in not a lane multiple —
    # exercises the no-pad partial edge block and full-K resident W.
    _check_f32(k1, B=1000, d_in=300, d_out=10)
    # bf16 storage path (halves HBM traffic for x and W; f32 accumulate).
    _check_bf16(k2, B=64, d_in=300, d_out=10)

    # NOTE: forward() returns logits only (no activation), matching the
    # PyTorch module; softmax (predict_prob) / argmax (predict) are separate
    # methods and are not part of forward.
    print("KERNEL_OK")
</pallas_src>

<mosaic_0001>
module attributes {stable_mosaic.version = 11 : i64} {
  func.func @_linear_bias_kernel(%arg0: i32, %arg1: memref<8x32xf32, #tpu.memory_space<vmem>>, %arg2: memref<32x128xf32, #tpu.memory_space<vmem>>, %arg3: memref<1x128xf32, #tpu.memory_space<vmem>>, %arg4: memref<8x128xf32, #tpu.memory_space<vmem>>) attributes {dimension_semantics = [#tpu.dimension_semantics<parallel>], iteration_bounds = array<i64: 1>, scalar_prefetch = 0 : i64, scratch_operands = 0 : i64, tpu.core_type = #tpu.core_type<tc>, window_params = [{transform_indices = @transform_0, window_bounds = array<i64: 8, 32>}, {pipeline_mode = #tpu.pipeline_mode<synchronous>, transform_indices = @transform_1, window_bounds = array<i64: 32, 128>}, {pipeline_mode = #tpu.pipeline_mode<synchronous>, transform_indices = @transform_2, window_bounds = array<i64: 1, 128>}, {transform_indices = @transform_3, window_bounds = array<i64: 8, 128>}]} {
    %c0 = arith.constant 0 : index
    %c0_0 = arith.constant 0 : index
    %0 = vector.load %arg1[%c0, %c0_0] : memref<8x32xf32, #tpu.memory_space<vmem>>, vector<8x32xf32>
    %c0_1 = arith.constant 0 : index
    %c0_2 = arith.constant 0 : index
    %1 = vector.load %arg2[%c0_1, %c0_2] : memref<32x128xf32, #tpu.memory_space<vmem>>, vector<32x128xf32>
    %cst = arith.constant dense<0.000000e+00> : vector<8x128xf32>
    %2 = tpu.matmul %0, %1, %cst {dimension_numbers = #tpu.dot_dimension_numbers<[1], [0], [0], [1], [0, 0, 1, 1], [], []>} : vector<8x32xf32>, vector<32x128xf32>, vector<8x128xf32> -> vector<8x128xf32>
    %c0_3 = arith.constant 0 : index
    %c0_4 = arith.constant 0 : index
    %3 = vector.load %arg3[%c0_3, %c0_4] : memref<1x128xf32, #tpu.memory_space<vmem>>, vector<1x128xf32>
    %4 = vector.broadcast %3 : vector<1x128xf32> to vector<8x128xf32>
    %5 = arith.addf %2, %4 : vector<8x128xf32>
    %c0_5 = arith.constant 0 : index
    %c0_6 = arith.constant 0 : index
    %6 = vector.load %arg4[%c0_5, %c0_6] : memref<8x128xf32, #tpu.memory_space<vmem>>, vector<8x128xf32>
    tpu.vector_store %arg4[%c0_5, %c0_6], %5 {strides = array<i32>} : memref<8x128xf32, #tpu.memory_space<vmem>>, vector<8x128xf32>,
    return
  }
  func.func @transform_0(%arg0: i32) -> (i32, i32) {
    %c0_i32 = arith.constant 0 : i32
    %c0_i32_0 = arith.constant 0 : i32
    return %arg0, %c0_i32 : i32, i32
  }
  func.func @transform_1(%arg0: i32) -> (i32, i32) {
    %c0_i32 = arith.constant 0 : i32
    %c0_i32_0 = arith.constant 0 : i32
    %c0_i32_1 = arith.constant 0 : i32
    return %c0_i32, %c0_i32_0 : i32, i32
  }
  func.func @transform_2(%arg0: i32) -> (i32, i32) {
    %c0_i32 = arith.constant 0 : i32
    %c0_i32_0 = arith.constant 0 : i32
    %c0_i32_1 = arith.constant 0 : i32
    return %c0_i32, %c0_i32_0 : i32, i32
  }
  func.func @transform_3(%arg0: i32) -> (i32, i32) {
    %c0_i32 = arith.constant 0 : i32
    %c0_i32_0 = arith.constant 0 : i32
    return %arg0, %c0_i32 : i32, i32
  }
}

</mosaic_0001>

<llo_original>
// kernel: tpu_custom_call.1
$region0: #{tpu_custom_call.1}
  #allocation0 [shape = 'u32[]', space=smem, size = 0x4, offset = 0x4, fixed_abs, tag = 'smem constant byte address 0x4 - core index']
  #allocation1 [shape = 'u32[72,128]{1,0:T(1,128)}', space=vmem, size = 0x9000, scoped, tag = 'internal scratch']
  %s0 = inlined_call_operand.hbm [shape: f32[8,32], index: 0, kind: input, shape index: {}]
  %s1 = inlined_call_operand.hbm [shape: f32[32,128], index: 1, kind: input, shape index: {}]
  %s2 = inlined_call_operand.vmem [shape: f32[1,128], index: 2, kind: input, shape index: {}]
  %s3 = inlined_call_operand.hbm [shape: f32[8,128], index: 3, kind: output, shape index: {}]
  %s4 = sld [smem:[#allocation0]]
  $region30: #{tpu_custom_call.1} parent=0
    _
  %s6 = ssub.s32 1, %s4
  %s7 = scalar_select 0, %s6, %s4
  $region1: #{tpu_custom_call.1} parent=0
    #allocation2 [shape = 'u8[4096]{0}', space=vmem, size = 0x1000, scoped, tag = 'input window, operand 0, single buffered']
    #allocation3 [shape = 's32[1]{0}', space=sflag, size = 0x4, scoped, tag = 'scoped memory for tpu_custom_call.1']
    #allocation4 [shape = 's32[1]{0}', space=sflag, size = 0x4, scoped, tag = 'scoped memory for tpu_custom_call.1']
    #allocation5 [shape = 'u8[16384]{0}', space=vmem, size = 0x4000, scoped, tag = 'input window, operand 1, single buffered']
    #allocation6 [shape = 's32[1]{0}', space=sflag, size = 0x4, scoped, tag = 'scoped memory for tpu_custom_call.1']
    #allocation7 [shape = 'u8[4096]{0}', space=vmem, size = 0x1000, scoped, tag = 'output window, operand 0, single buffered']
    %8 = vsyncpa [#allocation3], 0
    %9 = vsyncpa [#allocation6], 0
    %10 = vsyncpa [#allocation4], 0
    // Predicated region
    $region2: #{tpu_custom_call.1} parent=1 // pred_check
      _
    $region3: #{tpu_custom_call.1} parent=1 // pred_check_branch
      %12 = sbr.rel (0) target = $region5
    $region4: #{tpu_custom_call.1} parent=1 // pred_region
      %14 = vsyncadd [#allocation3], 0
      %s16 = sshll.u32 %s0, 4
      %s17 = int_to_ptr.hbm [resolvable:$true] %s16
      %s18 = sshll.u32 [#allocation2], 4
      %s19 = int_to_ptr.vmem [resolvable:$true] %s18
      %21 = dma.hbm_to_vmem [thread:$0]  %s17, 128, %s19, [#allocation3]
    $region5: #{tpu_custom_call.1} parent=1 // pred_fallthru
      _
    // Predicated region
    $region6: #{tpu_custom_call.1} parent=1 // pred_check
      _
    $region7: #{tpu_custom_call.1} parent=1 // pred_check_branch
      %23 = sbr.rel (0) target = $region9
    $region8: #{tpu_custom_call.1} parent=1 // pred_region
      %25 = vsyncadd [#allocation6], 0
      %s26 = sshll.u32 %s1, 4
      %s27 = int_to_ptr.hbm [resolvable:$true] %s26
      %s28 = sshll.u32 [#allocation5], 4
      %s29 = int_to_ptr.vmem [resolvable:$true] %s28
      %34 = dma.hbm_to_vmem [thread:$0]  %s27, 512, %s29, [#allocation6], 128, 128, 8
    $region9: #{tpu_custom_call.1} parent=1 // pred_fallthru
      _
    // Predicated region
    $region10: #{tpu_custom_call.1} parent=1 // pred_check
      _
    $region11: #{tpu_custom_call.1} parent=1 // pred_check_branch
      %36 = sbr.rel (0) target = $region13
    $region12: #{tpu_custom_call.1} parent=1 // pred_region
      _
    $region13: #{tpu_custom_call.1} parent=1 // pred_fallthru
      _
    // Predicated region
    $region14: #{tpu_custom_call.1} parent=1 // pred_check
      _
    $region15: #{tpu_custom_call.1} parent=1 // pred_check_branch
      %38 = sbr.rel (0) target = $region17
    $region16: #{tpu_custom_call.1} parent=1 // pred_region
      %40 = dma.done [#allocation3], 128
    $region17: #{tpu_custom_call.1} parent=1 // pred_fallthru
      _
    // Predicated region
    $region18: #{tpu_custom_call.1} parent=1 // pred_check
      _
    $region19: #{tpu_custom_call.1} parent=1 // pred_check_branch
      %42 = sbr.rel (0) target = $region21
    $region20: #{tpu_custom_call.1} parent=1 // pred_region
      %44 = dma.done [#allocation6], 512
    $region21: #{tpu_custom_call.1} parent=1 // pred_fallthru
      _
    %v45 = vld [vmem:[#allocation2] sm:$0xff]
    %v46 = vld [vmem:[#allocation5] sm:$0xff]
    %v47 = vld [vmem:[#allocation5 + $0x8] sm:$0xff]
    %v48 = vld [vmem:[#allocation5 + $0x10] sm:$0xff]
    %v49 = vld [vmem:[#allocation5 + $0x18] sm:$0xff]
    %v50 = vld [vmem:[%s2] sm:$0x1]
    %v52 = vperm.slane %v50, 0
    %vm54 = vcmask 261120
    %v56 = vsel %vm54, %v45, 0
    %58 = vmatpush.msra.mxu0 0.0
    %59 = vmatpush.msra.mxu0 0.0
    %60 = vmatpush.msra.mxu0 0.0
    %61 = vmatpush.msra.mxu0 0.0
    %62 = vmatpush.msra.mxu0 0.0
    %63 = vmatpush.msra.mxu0 0.0
    %64 = vmatpush.msra.mxu0 0.0
    %65 = vmatpush.msra.mxu0 0.0
    %66 = vmatpush.msra.mxu0 0.0
    %67 = vmatpush.msra.mxu0 0.0
    %68 = vmatpush.msra.mxu0 0.0
    %69 = vmatpush.msra.mxu0 0.0
    %70 = vmatpush.msra.mxu0 %v49
    %71 = vmatpush.msra.mxu0 %v48
    %72 = vmatpush.msra.mxu0 %v47
    %73 = vmatpush.msra.mxu0 %v46
    %74 = vmatmul.f32.gmra.mxu0 %v56
    %v75 = vpop.f32.mrf.mxu0
    %v76 = vadd.f32 %v52, %v75
    %77 = vdwg.mxu0
    %78 = vst [vmem:[#allocation7] sm:$0xff] %v76
    // Predicated region
    $region22: #{tpu_custom_call.1} parent=1 // pred_check
      _
    $region23: #{tpu_custom_call.1} parent=1 // pred_check_branch
      %80 = sbr.rel (0) target = $region25
    $region24: #{tpu_custom_call.1} parent=1 // pred_region
      %82 = vsyncadd [#allocation4], 0
      %s84 = sshll.u32 [#allocation7], 4
      %s85 = int_to_ptr.vmem [resolvable:$true] %s84
      %s86 = sshll.u32 %s3, 4
      %s87 = int_to_ptr.hbm [resolvable:$true] %s86
      %89 = dma.vmem_to_hbm [thread:$0]  %s85, 128, %s87, [#allocation4]
    $region25: #{tpu_custom_call.1} parent=1 // pred_fallthru
      _
    // Predicated region
    $region26: #{tpu_custom_call.1} parent=1 // pred_check
      _
    $region27: #{tpu_custom_call.1} parent=1 // pred_check_branch
      %91 = sbr.rel (0) target = $region29
    $region28: #{tpu_custom_call.1} parent=1 // pred_region
      %93 = dma.done [#allocation4], 128
    $region29: #{tpu_custom_call.1} parent=1 // pred_fallthru
      _
    %94 = vsyncpa [#allocation3], 1
    %95 = vsyncpa [#allocation6], 1
    %96 = vsyncpa [#allocation4], 1

</llo_original>
